<compile_context>
chip_gen: v7x
topology: tpu7x:2x2x1
jax: 0.10.0
libtpu: 0.0.40
codegen_flags: <defaults>
</compile_context>

<pallas_src>
import functools

import jax
import jax.numpy as jnp
from jax.experimental import pallas as pl
from jax.experimental.pallas import tpu as pltpu

VOCAB = 30522
D = 768
KSIZE = 3
LANE = 128
SUBLANE = 8


def _round_up(x, m):
    return (x + m - 1) // m * m


# ---------------------------------------------------------------------------
# pltpu.roll sign-convention probe (run once, cached). We only use non-negative
# shifts; the probe tells us whether roll(x, 1, axis=0)[i] == x[i-1] (numpy
# convention) so the conv taps bind to the correct shifted operand.
_ROLL_NUMPY = None


def _roll_matches_numpy():
    global _ROLL_NUMPY
    if _ROLL_NUMPY is None:
        def probe(x_ref, o_ref):
            o_ref[...] = pltpu.roll(x_ref[...], 1, axis=0)

        x = jnp.broadcast_to(jnp.arange(SUBLANE, dtype=jnp.int32)[:, None],
                             (SUBLANE, LANE))
        out = pl.pallas_call(
            probe, out_shape=jax.ShapeDtypeStruct((SUBLANE, LANE), jnp.int32))(x)
        _ROLL_NUMPY = bool(out[0, 0] == SUBLANE - 1)
    return _ROLL_NUMPY


def caml_kernel(x_ref, wconv_ref, bconv_ref, lw_ref, fb_ref, out_ref,
                xpad_ref, hb_ref, *, bb, p, seq_len, ct, sh_prev, sh_next):
    """Grid = (batch blocks, class tiles).

    x_ref   : (bb, L, D)      bf16  gathered embeddings (unpadded rows)
    wconv   : (3, D, D)       bf16  conv taps (k, in, out)
    bconv   : (1, D)          f32
    lw      : (1, D, 2*ct)    bf16  fused [U^T | final^T] tile
    fb      : (1, 1, ct)      f32   final bias tile
    out     : (1, bb, ct)     f32
    xpad    : (bb, p, D)      f32   scratch: packed, zero-padded activations
    hb      : (bb*p, D)       bf16  scratch: tanh(conv), reused per class tile
    """
    mb = bb * p

    @pl.when(pl.program_id(1) == 0)
    def _():
        # Build per-sequence zero-padded packed activations in VMEM (replaces
        # the wrapper-side jnp.pad HBM round trip).
        xpad_ref[...] = jnp.zeros_like(xpad_ref)
        xpad_ref[:, :seq_len, :] = x_ref[...].astype(xpad_ref.dtype)
        xf = xpad_ref[...].reshape(mb, D)                     # (mb, D) f32

        # Conv1d(768,768,k=3,padding=1) as three full-block MXU matmuls; the
        # +-1 row shifts go through the XLU (pltpu.roll) instead of
        # materializing sublane-unaligned slice copies. Wrapped rows land on
        # zero-pad rows (P >= L+1), so no valid output row is corrupted.
        x_prev = pltpu.roll(xf, sh_prev, axis=0)              # row l -> x[l-1]
        x_next = pltpu.roll(xf, sh_next, axis=0)              # row l -> x[l+1]
        acc = jnp.dot(x_prev.astype(jnp.bfloat16), wconv_ref[0],
                      preferred_element_type=jnp.float32)
        acc = acc + jnp.dot(xf.astype(jnp.bfloat16), wconv_ref[1],
                            preferred_element_type=jnp.float32)
        acc = acc + jnp.dot(x_next.astype(jnp.bfloat16), wconv_ref[2],
                            preferred_element_type=jnp.float32)
        hb_ref[...] = jnp.tanh(acc + bconv_ref[...]).astype(hb_ref.dtype)

    # Fused label matmul: one MXU pass (N = 2*ct lanes) producing attention
    # scores s[l,c] = <h[l],U[c]> and projections g[l,c] = <h[l],final_W[c]>.
    hb = hb_ref[...]                                          # (mb, D) bf16
    sg = jnp.dot(hb, lw_ref[0], preferred_element_type=jnp.float32)
    sg = sg.reshape(bb, p, 2 * ct)
    s = sg[:, :, :ct]
    g = sg[:, :, ct:]

    # Vectorized per-sequence masked softmax over the L valid rows + reduce:
    #   y[c] = sum_l softmax(s)[l,c] * g[l,c]
    row = jax.lax.broadcasted_iota(jnp.int32, (bb, p, 1), 1)
    s = jnp.where(row < seq_len, s, -jnp.inf)
    m = jnp.max(s, axis=1, keepdims=True)                     # (bb, 1, ct)
    e = jnp.exp(s - m)                                        # pad rows -> 0
    num = jnp.sum(e * g, axis=1)                              # (bb, ct)
    den = jnp.sum(e, axis=1)                                  # (bb, ct)
    y = num * pl.reciprocal(den, approx=True) + fb_ref[0]
    out_ref[0] = y.astype(out_ref.dtype)


def caml_forward(tokens, params):
    B, L = tokens.shape
    C = params["u_w"].shape[0]
    Cp = _round_up(C, LANE)                    # lane-dense classes
    P = _round_up(L + 1, SUBLANE)              # per-sequence padded length
    assert P >= L + 1                          # roll-wrap rows must be zero pads

    # Generation-aware sizing: v5e/v6e have 128 MiB physical VMEM, v7x 64 MiB.
    try:
        vmem_cap = int(pltpu.get_tpu_info().vmem_capacity_bytes)
    except Exception:
        vmem_cap = 64 * 1024 * 1024
    if vmem_cap >= 100 * 1024 * 1024:          # v5e / v6e
        max_rows, vmem_limit = 2048, 96 * 1024 * 1024
    else:                                      # v7x (and unknown -> conservative)
        max_rows, vmem_limit = 1024, 48 * 1024 * 1024

    # Class tiling: largest 128-multiple divisor of Cp that is <= 512 lanes.
    cp_units = Cp // LANE
    ct_units = 1
    for d in range(1, cp_units + 1):
        if cp_units % d == 0 and d * LANE <= 512:
            ct_units = d
    Ct = ct_units * LANE
    nct = Cp // Ct

    # Batch blocking: pack sequences along the MXU M dimension, but keep >= 2
    # grid blocks so the "parallel" axis can shard across both TensorCores.
    bb_cap = max(1, max_rows // P)
    bb_target = -(-B // 2)
    BB = max(1, min(bb_cap, bb_target))
    Bp = _round_up(B, BB)
    num_blocks = Bp // BB
    mb = BB * P

    if _roll_matches_numpy():
        sh_prev, sh_next = 1, mb - 1           # roll(x, 1)[l] == x[l-1]
    else:
        sh_prev, sh_next = mb - 1, 1

    # --- JAX glue: embedding gather, cast AFTER the gather (only B*L rows).
    # TODO(synk): fuse the embedding gather into the kernel (scalar-prefetched
    # token ids + manual per-row DMA from the HBM table) to remove this HBM
    # round trip of activations entirely.
    x = jnp.take(params["emb"], tokens, axis=0).astype(jnp.bfloat16)   # (B,L,D)
    if Bp != B:
        x = jnp.pad(x, ((0, Bp - B), (0, 0), (0, 0)))

    conv_w = params["conv_w"].astype(jnp.bfloat16)                     # (3,D,D)
    conv_b = params["conv_b"].reshape(1, D).astype(jnp.float32)
    uwT = jnp.zeros((D, Cp), jnp.bfloat16).at[:, :C].set(
        params["u_w"].T.astype(jnp.bfloat16))
    fwT = jnp.zeros((D, Cp), jnp.bfloat16).at[:, :C].set(
        params["f_w"].T.astype(jnp.bfloat16))
    # Fused, class-tiled label weights: tile c = [U_tile_c | final_tile_c].
    lw = jnp.stack([uwT.reshape(D, nct, Ct), fwT.reshape(D, nct, Ct)], axis=2)
    lw = lw.transpose(1, 0, 2, 3).reshape(nct, D, 2 * Ct)
    fb = jnp.zeros((Cp,), jnp.float32).at[:C].set(
        params["f_b"].astype(jnp.float32)).reshape(nct, 1, Ct)

    cost = pl.CostEstimate(
        flops=2 * num_blocks * mb * D * (3 * D + 2 * Cp),
        transcendentals=num_blocks * (mb * D + mb * Cp),       # tanh + exp
        bytes_accessed=(x.size * 2 + conv_w.size * 2 + lw.size * 2
                        + conv_b.size * 4 + fb.size * 4
                        + num_blocks * BB * Cp * 4),
    )

    kernel = functools.partial(caml_kernel, bb=BB, p=P, seq_len=L, ct=Ct,
                               sh_prev=sh_prev, sh_next=sh_next)

    def _call(buffer_constants):
        # Constants (conv taps / bias) keep the same block index over the whole
        # grid; single-buffering halves their VMEM footprint (helps v7x).
        const_kw = dict(pipeline_mode=pl.Buffered(1)) if buffer_constants else {}
        in_specs = [
            pl.BlockSpec((BB, L, D), lambda b, c: (b, 0, 0)),            # activations
            pl.BlockSpec((KSIZE, D, D), lambda b, c: (0, 0, 0), **const_kw),
            pl.BlockSpec((1, D), lambda b, c: (0, 0), **const_kw),
            pl.BlockSpec((1, D, 2 * Ct), lambda b, c: (c, 0, 0)),        # fused label W
            pl.BlockSpec((1, 1, Ct), lambda b, c: (c, 0, 0)),            # final bias
        ]
        return pl.pallas_call(
            kernel,
            out_shape=jax.ShapeDtypeStruct((num_blocks, BB, Cp), jnp.float32),
            grid_spec=pltpu.PrefetchScalarGridSpec(
                num_scalar_prefetch=0,
                grid=(num_blocks, nct),
                in_specs=in_specs,
                out_specs=pl.BlockSpec((1, BB, Ct), lambda b, c: (b, 0, c)),
                scratch_shapes=[
                    pltpu.VMEM((BB, P, D), jnp.float32),     # packed padded activations
                    pltpu.VMEM((BB * P, D), jnp.bfloat16),   # tanh(conv), reused per class tile
                ],
            ),
            compiler_params=pltpu.CompilerParams(
                dimension_semantics=("parallel", "arbitrary"),
                vmem_limit_bytes=vmem_limit,
            ),
            cost_estimate=cost,
        )(x, conv_w, conv_b, lw, fb)

    try:
        out = _call(True)
    except Exception:
        # Fallback in case pipeline_mode=pl.Buffered(1) is unsupported here.
        out = _call(False)

    return out.reshape(Bp, Cp)[:B, :C]


def caml_reference(tokens, params):
    # Pure-JAX reference mirroring the PyTorch forward (same bf16 operand casts
    # as the kernel, f32 accumulation).
    x = jnp.take(params["emb"], tokens, axis=0).astype(jnp.bfloat16)   # (B,L,D)
    B, L, _ = x.shape
    xp = jnp.pad(x, ((0, 0), (1, 1), (0, 0)))
    w = params["conv_w"].astype(jnp.bfloat16)
    conv = params["conv_b"][None, None, :].astype(jnp.float32)
    for k in range(KSIZE):
        conv = conv + jnp.einsum("bld,do->blo", xp[:, k:k + L, :], w[k],
                                 preferred_element_type=jnp.float32)
    h = jnp.tanh(conv)                                   # (B, L, D) f32
    hb = h.astype(jnp.bfloat16)
    uw = params["u_w"].astype(jnp.bfloat16)
    fw = params["f_w"].astype(jnp.bfloat16)
    scores = jnp.einsum("cd,bld->bcl", uw, hb, preferred_element_type=jnp.float32)
    alpha = jax.nn.softmax(scores, axis=2)               # softmax over L
    g = jnp.einsum("bld,cd->blc", hb, fw, preferred_element_type=jnp.float32)
    y = jnp.einsum("bcl,blc->bc", alpha, g) + params["f_b"][None, :]
    return y


def init_params(key, class_num):
    ks = jax.random.split(key, 6)
    emb = 0.02 * jax.random.normal(ks[0], (VOCAB, D), jnp.float32)
    emb = emb.at[0].set(0.0)                             # padding_idx=0
    cb = 1.0 / jnp.sqrt(D * KSIZE)
    # conv_w stored as (k, D_in, D_out); equals PyTorch weight (out, in, k) permuted.
    conv_w = jax.random.uniform(ks[1], (KSIZE, D, D), jnp.float32, -cb, cb)
    conv_b = jax.random.uniform(ks[2], (D,), jnp.float32, -cb, cb)
    lb = 1.0 / jnp.sqrt(D)
    u_w = jax.random.uniform(ks[3], (class_num, D), jnp.float32, -lb, lb)
    f_w = jax.random.uniform(ks[4], (class_num, D), jnp.float32, -lb, lb)
    f_b = jax.random.uniform(ks[5], (class_num,), jnp.float32, -lb, lb)
    return {"emb": emb, "conv_w": conv_w, "conv_b": conv_b,
            "u_w": u_w, "f_w": f_w, "f_b": f_b}


if __name__ == "__main__":
    key = jax.random.PRNGKey(0)
    kp, kt = jax.random.split(key)
    B, L, C = 2, 16, 8                                   # batch, seq, class_num
    params = init_params(kp, C)
    tokens = jax.random.randint(kt, (B, L), 0, VOCAB, dtype=jnp.int32)

    y = jax.block_until_ready(caml_forward(tokens, params))
    y_ref = jax.block_until_ready(caml_reference(tokens, params))
    assert y.shape == (B, C)
    assert jnp.allclose(y, y_ref, rtol=1e-2, atol=1e-2), "kernel output mismatch vs reference"
    print("KERNEL_OK")
</pallas_src>

<mosaic_0001>
module attributes {stable_mosaic.version = 11 : i64} {
  func.func @probe(%arg0: memref<8x128xi32, #tpu.memory_space<vmem>>, %arg1: memref<8x128xi32, #tpu.memory_space<vmem>>) attributes {dimension_semantics = [], scalar_prefetch = 0 : i64, scratch_operands = 0 : i64, tpu.core_type = #tpu.core_type<tc>} {
    %c0 = arith.constant 0 : index
    %c0_0 = arith.constant 0 : index
    %0 = vector.load %arg0[%c0, %c0_0] : memref<8x128xi32, #tpu.memory_space<vmem>>, vector<8x128xi32>
    %c1_i32 = arith.constant 1 : i32
    %1 = tpu.dynamic_rotate %0 by %c1_i32 dim 0 : vector<8x128xi32>, i32 -> vector<8x128xi32>
    %c0_1 = arith.constant 0 : index
    %c0_2 = arith.constant 0 : index
    %2 = vector.load %arg1[%c0_1, %c0_2] : memref<8x128xi32, #tpu.memory_space<vmem>>, vector<8x128xi32>
    tpu.vector_store %arg1[%c0_1, %c0_2], %1 {strides = array<i32>} : memref<8x128xi32, #tpu.memory_space<vmem>>, vector<8x128xi32>,
    return
  }
}

</mosaic_0001>

<llo_original>
// kernel: tpu_custom_call.1
$region0: #{tpu_custom_call.1}
  #allocation0 [shape = 'u32[]', space=smem, size = 0x4, offset = 0x4, fixed_abs, tag = 'smem constant byte address 0x4 - core index']
  #allocation1 [shape = 'u32[144,128]{1,0:T(1,128)}', space=vmem, size = 0x12000, scoped, tag = 'internal scratch']
  %s0 = inlined_call_operand.hbm [shape: s32[8,128], index: 0, kind: input, shape index: {}]
  %s1 = inlined_call_operand.hbm [shape: s32[8,128], index: 1, kind: output, shape index: {}]
  %s2 = sld [smem:[#allocation0]]
  $region18: #{tpu_custom_call.1} parent=0
    _
  %s4 = ssub.s32 1, %s2
  %s5 = scalar_select 0, %s4, %s2
  $region1: #{tpu_custom_call.1} parent=0
    #allocation2 [shape = 'u8[4096]{0}', space=vmem, size = 0x1000, scoped, tag = 'input window, operand 0, single buffered']
    #allocation3 [shape = 's32[1]{0}', space=sflag, size = 0x4, scoped, tag = 'scoped memory for tpu_custom_call.1']
    #allocation4 [shape = 's32[1]{0}', space=sflag, size = 0x4, scoped, tag = 'scoped memory for tpu_custom_call.1']
    #allocation5 [shape = 'u8[4096]{0}', space=vmem, size = 0x1000, scoped, tag = 'output window, operand 0, single buffered']
    %6 = vsyncpa [#allocation3], 0
    %7 = vsyncpa [#allocation4], 0
    // Predicated region
    $region2: #{tpu_custom_call.1} parent=1 // pred_check
      _
    $region3: #{tpu_custom_call.1} parent=1 // pred_check_branch
      %9 = sbr.rel (0) target = $region5
    $region4: #{tpu_custom_call.1} parent=1 // pred_region
      %s11 = ssub.s32 128, 128
      %12 = vsyncadd [#allocation3], %s11
      %s14 = sshll.u32 [#allocation2], 4
      %s15 = int_to_ptr.vmem [resolvable:$true] %s14
      %17 = dma.hbm_to_vmem [thread:$0]  %s0, 128, %s15, [#allocation3]
    $region5: #{tpu_custom_call.1} parent=1 // pred_fallthru
      _
    // Predicated region
    $region6: #{tpu_custom_call.1} parent=1 // pred_check
      _
    $region7: #{tpu_custom_call.1} parent=1 // pred_check_branch
      %19 = sbr.rel (0) target = $region9
    $region8: #{tpu_custom_call.1} parent=1 // pred_region
      %20 = dma.done [#allocation3], 128
    $region9: #{tpu_custom_call.1} parent=1 // pred_fallthru
      _
    %v21 = vld [vmem:[#allocation2] sm:$0xff]
    %v22 = vrot.slane %v21, 7
    %23 = vst [vmem:[#allocation5] sm:$0xff] %v22
    // Predicated region
    $region10: #{tpu_custom_call.1} parent=1 // pred_check
      _
    $region11: #{tpu_custom_call.1} parent=1 // pred_check_branch
      %25 = sbr.rel (0) target = $region13
    $region12: #{tpu_custom_call.1} parent=1 // pred_region
      %s27 = ssub.s32 128, 128
      %28 = vsyncadd [#allocation4], %s27
      %s30 = sshll.u32 [#allocation5], 4
      %s31 = int_to_ptr.vmem [resolvable:$true] %s30
      %33 = dma.vmem_to_hbm [thread:$0]  %s31, 128, %s1, [#allocation4]
    $region13: #{tpu_custom_call.1} parent=1 // pred_fallthru
      _
    // Predicated region
    $region14: #{tpu_custom_call.1} parent=1 // pred_check
      _
    $region15: #{tpu_custom_call.1} parent=1 // pred_check_branch
      %35 = sbr.rel (0) target = $region17
    $region16: #{tpu_custom_call.1} parent=1 // pred_region
      %36 = dma.done [#allocation4], 128
    $region17: #{tpu_custom_call.1} parent=1 // pred_fallthru
      _
    %37 = vsyncpa [#allocation3], 1
    %38 = vsyncpa [#allocation4], 1

</llo_original>
